<compile_context>
chip_gen: v7x
topology: tpu7x:2x2x1
jax: 0.10.0
libtpu: 0.0.40
codegen_flags: <defaults>
</compile_context>

<pallas_src>
import jax
import jax.numpy as jnp
from jax.experimental import pallas as pl
from jax.experimental.pallas import tpu as pltpu

LEAKY_SLOPE = 0.01   # nn.LeakyReLU() default negative_slope
LANE = 128


def _round_up(x, m):
    return ((x + m - 1) // m) * m


def mlp_kernel(x_ref, *refs):
    """Whole MLP fused: matmul + bias + LeakyReLU per layer, all operands in VMEM."""
    out_ref = refs[-1]
    params = refs[:-1]                       # [w0, b0, w1, b1, ..., wL, bL] (lane-padded)
    n_layers = len(params) // 2

    h = x_ref[...].astype(jnp.float32)
    for layer in range(n_layers):
        w = params[2 * layer][...].astype(jnp.float32)       # (d_in_pad, d_out_pad)
        b = params[2 * layer + 1][...].astype(jnp.float32)   # (1, d_out_pad)
        h = jnp.dot(h, w, preferred_element_type=jnp.float32) + b
        if layer < n_layers - 1:
            # LeakyReLU: for 0 < slope < 1, max(h, slope*h) == where(h > 0, h, slope*h).
            h = jnp.maximum(h, LEAKY_SLOPE * h)
    out_ref[...] = h.astype(out_ref.dtype)


def _choose_tile_b(batch, d_max_pad, itemsize):
    """Large batch tiles amortize per-grid-step overhead; keep >=2 grid steps (v7x has 2
    TensorCores) and keep live activations (tile_b * d_max_pad * 4B) modest vs. vregs."""
    sub = 8 * (4 // max(1, itemsize))                    # 8 for f32, 16 for bf16, ...
    cap = max(sub, (256 * 1024) // (4 * d_max_pad))      # <= full vreg file of f32 live
    cap = min(cap, 512)
    tile = min(cap, max(sub, batch // 2))                # try to leave >=2 grid steps
    return max(sub, (tile // sub) * sub)


def mlp_forward(x, params, *, tile_b=None):
    """x: (B, input_dim); params: list of (W(d_in, d_out), b(1, d_out)) tuples
    (PyTorch nn.Linear weights stored transposed so the kernel computes h @ W + b)."""
    B, d_in = x.shape
    out_dim = params[-1][0].shape[1]
    compute_dtype = x.dtype

    # ---- lane-dense zero padding of every feature dim (exact; see header) ----
    dims = [d_in] + [w.shape[1] for (w, _) in params]
    dims_pad = [_round_up(d, LANE) for d in dims]

    flat, in_specs = [], []
    for li, (w, b) in enumerate(params):
        wp = jnp.zeros((dims_pad[li], dims_pad[li + 1]), w.dtype)
        wp = wp.at[: w.shape[0], : w.shape[1]].set(w)
        bp = jnp.zeros((1, dims_pad[li + 1]), b.dtype)
        bp = bp.at[:, : b.shape[1]].set(b)
        flat.extend([wp, bp])
        # Whole (small) weight/bias resident every grid step; constant block index.
        in_specs.append(pl.BlockSpec(wp.shape, lambda i: (0, 0)))
        in_specs.append(pl.BlockSpec(bp.shape, lambda i: (0, 0)))

    # ---- batch tiling: big tile, ragged batches padded to a tile multiple ----
    if tile_b is None:
        tile_b = _choose_tile_b(B, max(dims_pad), jnp.dtype(compute_dtype).itemsize)
    B_pad = _round_up(B, tile_b)

    x_pad = jnp.zeros((B_pad, dims_pad[0]), compute_dtype).at[:B, :d_in].set(x)

    y_pad = pl.pallas_call(
        mlp_kernel,
        out_shape=jax.ShapeDtypeStruct((B_pad, dims_pad[-1]), compute_dtype),
        grid=(B_pad // tile_b,),
        in_specs=[pl.BlockSpec((tile_b, dims_pad[0]), lambda i: (i, 0))] + in_specs,
        out_specs=pl.BlockSpec((tile_b, dims_pad[-1]), lambda i: (i, 0)),
        compiler_params=pltpu.CompilerParams(
            dimension_semantics=("parallel",),
            vmem_limit_bytes=48 * 1024 * 1024,
        ),
    )(x_pad, *flat)

    return y_pad[:B, :out_dim]


def init_mlp_params(key, input_dim, out_dim, hidden_dim, hidden_num, dtype=jnp.float32):
    """Deterministic synthetic init matching nn.Linear shapes (stored transposed)."""
    dims = [input_dim] + [hidden_dim] * hidden_num + [out_dim]
    params = []
    for d_in, d_out in zip(dims[:-1], dims[1:]):
        key, kw, kb = jax.random.split(key, 3)
        bound = 1.0 / (d_in ** 0.5)   # same scale as PyTorch's default uniform bound
        w = jax.random.uniform(kw, (d_in, d_out), dtype, minval=-bound, maxval=bound)
        b = jax.random.uniform(kb, (1, d_out), dtype, minval=-bound, maxval=bound)
        params.append((w, b))
    return params


def mlp_reference(x, params):
    h = x.astype(jnp.float32)
    for i, (w, b) in enumerate(params):
        h = h @ w + b
        if i < len(params) - 1:
            h = jnp.maximum(h, LEAKY_SLOPE * h)
    return h.astype(x.dtype)


if __name__ == "__main__":
    input_dim, out_dim, hidden_dim, hidden_num = 16, 8, 32, 2
    batch = 256   # gives tile_b=128 -> grid=(2,) "parallel": both v7x TensorCores get work

    key = jax.random.PRNGKey(0)
    kx, kp = jax.random.split(key)
    x = jax.random.normal(kx, (batch, input_dim), jnp.float32)
    params = init_mlp_params(kp, input_dim, out_dim, hidden_dim, hidden_num)

    y = mlp_forward(x, params)
    y = jax.block_until_ready(y)

    y_ref = mlp_reference(x, params)
    assert y.shape == (batch, out_dim), y.shape
    assert jnp.allclose(y, y_ref, atol=1e-5, rtol=1e-5)

    print("KERNEL_OK")
</pallas_src>

<mosaic_0001>
module attributes {stable_mosaic.version = 11 : i64} {
  func.func @mlp_kernel(%arg0: i32, %arg1: memref<128x128xf32, #tpu.memory_space<vmem>>, %arg2: memref<128x128xf32, #tpu.memory_space<vmem>>, %arg3: memref<1x128xf32, #tpu.memory_space<vmem>>, %arg4: memref<128x128xf32, #tpu.memory_space<vmem>>, %arg5: memref<1x128xf32, #tpu.memory_space<vmem>>, %arg6: memref<128x128xf32, #tpu.memory_space<vmem>>, %arg7: memref<1x128xf32, #tpu.memory_space<vmem>>, %arg8: memref<128x128xf32, #tpu.memory_space<vmem>>) attributes {dimension_semantics = [#tpu.dimension_semantics<parallel>], iteration_bounds = array<i64: 2>, scalar_prefetch = 0 : i64, scratch_operands = 0 : i64, tpu.core_type = #tpu.core_type<tc>, window_params = [{transform_indices = @transform_0, window_bounds = array<i64: 128, 128>}, {pipeline_mode = #tpu.pipeline_mode<synchronous>, transform_indices = @transform_1, window_bounds = array<i64: 128, 128>}, {pipeline_mode = #tpu.pipeline_mode<synchronous>, transform_indices = @transform_2, window_bounds = array<i64: 1, 128>}, {pipeline_mode = #tpu.pipeline_mode<synchronous>, transform_indices = @transform_3, window_bounds = array<i64: 128, 128>}, {pipeline_mode = #tpu.pipeline_mode<synchronous>, transform_indices = @transform_4, window_bounds = array<i64: 1, 128>}, {pipeline_mode = #tpu.pipeline_mode<synchronous>, transform_indices = @transform_5, window_bounds = array<i64: 128, 128>}, {pipeline_mode = #tpu.pipeline_mode<synchronous>, transform_indices = @transform_6, window_bounds = array<i64: 1, 128>}, {transform_indices = @transform_7, window_bounds = array<i64: 128, 128>}]} {
    %c0 = arith.constant 0 : index
    %c0_0 = arith.constant 0 : index
    %0 = vector.load %arg1[%c0, %c0_0] : memref<128x128xf32, #tpu.memory_space<vmem>>, vector<128x128xf32>
    %c0_1 = arith.constant 0 : index
    %c0_2 = arith.constant 0 : index
    %1 = vector.load %arg2[%c0_1, %c0_2] : memref<128x128xf32, #tpu.memory_space<vmem>>, vector<128x128xf32>
    %c0_3 = arith.constant 0 : index
    %c0_4 = arith.constant 0 : index
    %2 = vector.load %arg3[%c0_3, %c0_4] : memref<1x128xf32, #tpu.memory_space<vmem>>, vector<1x128xf32>
    %cst = arith.constant dense<0.000000e+00> : vector<128x128xf32>
    %3 = tpu.matmul %0, %1, %cst {dimension_numbers = #tpu.dot_dimension_numbers<[1], [0], [0], [1], [0, 0, 1, 1], [], []>} : vector<128x128xf32>, vector<128x128xf32>, vector<128x128xf32> -> vector<128x128xf32>
    %4 = vector.broadcast %2 : vector<1x128xf32> to vector<128x128xf32>
    %5 = arith.addf %3, %4 : vector<128x128xf32>
    %cst_5 = arith.constant 0.00999999977 : f32
    %6 = vector.broadcast %cst_5 : f32 to vector<128x128xf32>
    %7 = arith.mulf %6, %5 : vector<128x128xf32>
    %8 = arith.maximumf %5, %7 : vector<128x128xf32>
    %c0_6 = arith.constant 0 : index
    %c0_7 = arith.constant 0 : index
    %9 = vector.load %arg4[%c0_6, %c0_7] : memref<128x128xf32, #tpu.memory_space<vmem>>, vector<128x128xf32>
    %c0_8 = arith.constant 0 : index
    %c0_9 = arith.constant 0 : index
    %10 = vector.load %arg5[%c0_8, %c0_9] : memref<1x128xf32, #tpu.memory_space<vmem>>, vector<1x128xf32>
    %cst_10 = arith.constant dense<0.000000e+00> : vector<128x128xf32>
    %11 = tpu.matmul %8, %9, %cst_10 {dimension_numbers = #tpu.dot_dimension_numbers<[1], [0], [0], [1], [0, 0, 1, 1], [], []>} : vector<128x128xf32>, vector<128x128xf32>, vector<128x128xf32> -> vector<128x128xf32>
    %12 = vector.broadcast %10 : vector<1x128xf32> to vector<128x128xf32>
    %13 = arith.addf %11, %12 : vector<128x128xf32>
    %cst_11 = arith.constant 0.00999999977 : f32
    %14 = vector.broadcast %cst_11 : f32 to vector<128x128xf32>
    %15 = arith.mulf %14, %13 : vector<128x128xf32>
    %16 = arith.maximumf %13, %15 : vector<128x128xf32>
    %c0_12 = arith.constant 0 : index
    %c0_13 = arith.constant 0 : index
    %17 = vector.load %arg6[%c0_12, %c0_13] : memref<128x128xf32, #tpu.memory_space<vmem>>, vector<128x128xf32>
    %c0_14 = arith.constant 0 : index
    %c0_15 = arith.constant 0 : index
    %18 = vector.load %arg7[%c0_14, %c0_15] : memref<1x128xf32, #tpu.memory_space<vmem>>, vector<1x128xf32>
    %cst_16 = arith.constant dense<0.000000e+00> : vector<128x128xf32>
    %19 = tpu.matmul %16, %17, %cst_16 {dimension_numbers = #tpu.dot_dimension_numbers<[1], [0], [0], [1], [0, 0, 1, 1], [], []>} : vector<128x128xf32>, vector<128x128xf32>, vector<128x128xf32> -> vector<128x128xf32>
    %20 = vector.broadcast %18 : vector<1x128xf32> to vector<128x128xf32>
    %21 = arith.addf %19, %20 : vector<128x128xf32>
    %c0_17 = arith.constant 0 : index
    %c0_18 = arith.constant 0 : index
    %22 = vector.load %arg8[%c0_17, %c0_18] : memref<128x128xf32, #tpu.memory_space<vmem>>, vector<128x128xf32>
    tpu.vector_store %arg8[%c0_17, %c0_18], %21 {strides = array<i32>} : memref<128x128xf32, #tpu.memory_space<vmem>>, vector<128x128xf32>,
    return
  }
  func.func @transform_0(%arg0: i32) -> (i32, i32) {
    %c0_i32 = arith.constant 0 : i32
    %c0_i32_0 = arith.constant 0 : i32
    return %arg0, %c0_i32 : i32, i32
  }
  func.func @transform_1(%arg0: i32) -> (i32, i32) {
    %c0_i32 = arith.constant 0 : i32
    %c0_i32_0 = arith.constant 0 : i32
    %c0_i32_1 = arith.constant 0 : i32
    return %c0_i32, %c0_i32_0 : i32, i32
  }
  func.func @transform_2(%arg0: i32) -> (i32, i32) {
    %c0_i32 = arith.constant 0 : i32
    %c0_i32_0 = arith.constant 0 : i32
    %c0_i32_1 = arith.constant 0 : i32
    return %c0_i32, %c0_i32_0 : i32, i32
  }
  func.func @transform_3(%arg0: i32) -> (i32, i32) {
    %c0_i32 = arith.constant 0 : i32
    %c0_i32_0 = arith.constant 0 : i32
    %c0_i32_1 = arith.constant 0 : i32
    return %c0_i32, %c0_i32_0 : i32, i32
  }
  func.func @transform_4(%arg0: i32) -> (i32, i32) {
    %c0_i32 = arith.constant 0 : i32
    %c0_i32_0 = arith.constant 0 : i32
    %c0_i32_1 = arith.constant 0 : i32
    return %c0_i32, %c0_i32_0 : i32, i32
  }
  func.func @transform_5(%arg0: i32) -> (i32, i32) {
    %c0_i32 = arith.constant 0 : i32
    %c0_i32_0 = arith.constant 0 : i32
    %c0_i32_1 = arith.constant 0 : i32
    return %c0_i32, %c0_i32_0 : i32, i32
  }
  func.func @transform_6(%arg0: i32) -> (i32, i32) {
    %c0_i32 = arith.constant 0 : i32
    %c0_i32_0 = arith.constant 0 : i32
    %c0_i32_1 = arith.constant 0 : i32
    return %c0_i32, %c0_i32_0 : i32, i32
  }
  func.func @transform_7(%arg0: i32) -> (i32, i32) {
    %c0_i32 = arith.constant 0 : i32
    %c0_i32_0 = arith.constant 0 : i32
    return %arg0, %c0_i32 : i32, i32
  }
}

</mosaic_0001>

<llo_original>
// kernel: tpu_custom_call.1
$region0: #{tpu_custom_call.1}
  #allocation0 [shape = 'u32[]', space=smem, size = 0x4, offset = 0x4, fixed_abs, tag = 'smem constant byte address 0x4 - core index']
  #allocation1 [shape = 'u32[144,128]{1,0:T(1,128)}', space=vmem, size = 0x12000, scoped, tag = 'internal scratch']
  %s0 = inlined_call_operand.hbm [shape: f32[256,128], index: 0, kind: input, shape index: {}]
  %s1 = inlined_call_operand.hbm [shape: f32[128,128], index: 1, kind: input, shape index: {}]
  %s2 = inlined_call_operand.vmem [shape: f32[1,128], index: 2, kind: input, shape index: {}]
  %s3 = inlined_call_operand.hbm [shape: f32[128,128], index: 3, kind: input, shape index: {}]
  %s4 = inlined_call_operand.vmem [shape: f32[1,128], index: 4, kind: input, shape index: {}]
  %s5 = inlined_call_operand.hbm [shape: f32[128,128], index: 5, kind: input, shape index: {}]
  %s6 = inlined_call_operand.vmem [shape: f32[1,128], index: 6, kind: input, shape index: {}]
  %s7 = inlined_call_operand.hbm [shape: f32[256,128], index: 7, kind: output, shape index: {}]
  %s8 = sld [smem:[#allocation0]]
  $region77: #{tpu_custom_call.1} parent=0
    _
  %s10 = ssub.s32 1, %s8
  %s11 = scalar_select 0, %s10, %s8
  $region1: #{tpu_custom_call.1} parent=0
    #allocation2 [shape = 'u8[131072]{0}', space=vmem, size = 0x20000, scoped, tag = 'input window, operand 0']
    #allocation3 [shape = 's32[2]{0}', space=sflag, size = 0x8, scoped, tag = 'scoped memory for tpu_custom_call.1']
    #allocation4 [shape = 's32[2]{0}', space=sflag, size = 0x8, scoped, tag = 'scoped memory for tpu_custom_call.1']
    #allocation5 [shape = 'u8[65536]{0}', space=vmem, size = 0x10000, scoped, tag = 'input window, operand 1, single buffered']
    #allocation6 [shape = 's32[1]{0}', space=sflag, size = 0x4, scoped, tag = 'scoped memory for tpu_custom_call.1']
    #allocation7 [shape = 'u8[65536]{0}', space=vmem, size = 0x10000, scoped, tag = 'input window, operand 3, single buffered']
    #allocation8 [shape = 'u8[65536]{0}', space=vmem, size = 0x10000, scoped, tag = 'input window, operand 5, single buffered']
    #allocation9 [shape = 's32[1]{0}', space=sflag, size = 0x4, scoped, tag = 'scoped memory for tpu_custom_call.1']
    #allocation10 [shape = 'u8[131072]{0}', space=vmem, size = 0x20000, scoped, tag = 'output window, operand 0']
    %12 = vsyncpa [#allocation3], 0
    %s13 = scalar_lea.sflag [#allocation3], 1
    %14 = vsyncpa %s13, 0
    %15 = vsyncpa [#allocation6], 0
    %16 = vsyncpa [#allocation9], 0
    %17 = vsyncpa [#allocation4], 0
    %s18 = scalar_lea.sflag [#allocation4], 1
    %19 = vsyncpa %s18, 0
    loop: start=0, step=1, limit=4
    $region2: #{tpu_custom_call.1} parent=1 // loop_pre_header
      _
    $region3: #{tpu_custom_call.1} parent=1 // loop_header
      %s21 = sphi 0, %s25
      %p22 = scmp.ge.s32.totalorder %s21, 4
      %s31 = sphi 0, %s33
      %s34 = sphi 0, %s31
      %s35 = sphi 0, %s34
      %s51 = sphi 0, %s35
      %s55 = sphi 0, %s55
      %s57 = sphi 0, %s55
      %s58 = sphi 0, %s57
      %s72 = sphi 0, %s58
      %s76 = sphi 0, %s76
      %s78 = sphi 0, %s76
      %s79 = sphi 0, %s78
      %s93 = sphi 0, %s79
      %s97 = sphi 0, %s97
      %s99 = sphi 0, %s97
      %s100 = sphi 0, %s99
      %s114 = sphi 0, %s100
      %s118 = sphi 0, %s118
      %s120 = sphi 0, %s118
      %s121 = sphi 0, %s120
      %s135 = sphi 0, %s121
      %s139 = sphi 0, %s139
      %s141 = sphi 0, %s139
      %s142 = sphi 0, %s141
      %s156 = sphi 0, %s142
      %s160 = sphi 0, %s160
      %s162 = sphi 0, %s160
      %s163 = sphi 0, %s162
      %s177 = sphi 0, %s163
      %s183 = sphi 0, %s185
      %s186 = sphi 0, %s183
      %s187 = sphi 0, %s186
      %s203 = sphi 0, %s187
    $region4: #{tpu_custom_call.1} parent=1 // loop_header_branch
      %24 = sbr.rel (%p22) target = $region8
    $region5: #{tpu_custom_call.1} parent=1 // loop_body
      %s26 = ssub.s32 %s21, 1
      %s27 = ssub.s32 %s21, 2
      %s28 = sadd.s32 %s21, 1
      %s29 = ssub.s32 %s21, %s28
      %p30 = scmp.eq.s32.totalorder %s29, 0
      %s32 = sadd.s32 %s31, 1
      %s33 = scalar_select %p30, %s31, %s32
      %p36 = pneg %p30
      %p37 = scmp.eq.s32.totalorder %s21, 1
      %p38 = por %p36, %p37
      %p39 = scmp.ne.s32.totalorder %s31, %s34
      %p40 = scmp.eq.s32.totalorder %s21, 0
      %p41 = por %p39, %p40
      %p42 = scmp.ne.s32.totalorder %s31, %s34
      %p43 = scmp.eq.s32.totalorder %s26, 1
      %p44 = por %p42, %p43
      %p45 = scmp.ne.s32.totalorder %s34, %s35
      %p46 = scmp.eq.s32.totalorder %s26, 0
      %p47 = por %p45, %p46
      %p48 = scmp.ne.s32.totalorder %s34, %s35
      %p49 = scmp.eq.s32.totalorder %s27, 1
      %p50 = por %p48, %p49
      %p52 = scmp.ne.s32.totalorder %s35, %s51
      %p53 = scmp.eq.s32.totalorder %s27, 0
      %p54 = por %p52, %p53
      %s56 = sadd.s32 %s55, 1
      %p59 = scmp.eq.s32.totalorder %s21, 1
      %p60 = scmp.ne.s32.totalorder %s55, %s57
      %p61 = scmp.eq.s32.totalorder %s21, 0
      %p62 = por %p60, %p61
      %p63 = scmp.ne.s32.totalorder %s55, %s57
      %p64 = scmp.eq.s32.totalorder %s26, 1
      %p65 = por %p63, %p64
      %p66 = scmp.ne.s32.totalorder %s57, %s58
      %p67 = scmp.eq.s32.totalorder %s26, 0
      %p68 = por %p66, %p67
      %p69 = scmp.ne.s32.totalorder %s57, %s58
      %p70 = scmp.eq.s32.totalorder %s27, 1
      %p71 = por %p69, %p70
      %p73 = scmp.ne.s32.totalorder %s58, %s72
      %p74 = scmp.eq.s32.totalorder %s27, 0
      %p75 = por %p73, %p74
      %s77 = sadd.s32 %s76, 1
      %p80 = scmp.eq.s32.totalorder %s21, 1
      %p81 = scmp.ne.s32.totalorder %s76, %s78
      %p82 = scmp.eq.s32.totalorder %s21, 0
      %p83 = por %p81, %p82
      %p84 = scmp.ne.s32.totalorder %s76, %s78
      %p85 = scmp.eq.s32.totalorder %s26, 1
      %p86 = por %p84, %p85
      %p87 = scmp.ne.s32.totalorder %s78, %s79
      %p88 = scmp.eq.s32.totalorder %s26, 0
      %p89 = por %p87, %p88
      %p90 = scmp.ne.s32.totalorder %s78, %s79
      %p91 = scmp.eq.s32.totalorder %s27, 1
      %p92 = por %p90, %p91
      %p94 = scmp.ne.s32.totalorder %s79, %s93
      %p95 = scmp.eq.s32.totalorder %s27, 0
      %p96 = por %p94, %p95
      %s98 = sadd.s32 %s97, 1
      %p101 = scmp.eq.s32.totalorder %s21, 1
      %p102 = scmp.ne.s32.totalorder %s97, %s99
      %p103 = scmp.eq.s32.totalorder %s21, 0
      %p104 = por %p102, %p103
      %p105 = scmp.ne.s32.totalorder %s97, %s99
      %p106 = scmp.eq.s32.totalorder %s26, 1
      %p107 = por %p105, %p106
      %p108 = scmp.ne.s32.totalorder %s99, %s100
      %p109 = scmp.eq.s32.totalorder %s26, 0
      %p110 = por %p108, %p109
      %p111 = scmp.ne.s32.totalorder %s99, %s100
      %p112 = scmp.eq.s32.totalorder %s27, 1
      %p113 = por %p111, %p112
      %p115 = scmp.ne.s32.totalorder %s100, %s114
      %p116 = scmp.eq.s32.totalorder %s27, 0
      %p117 = por %p115, %p116
      %s119 = sadd.s32 %s118, 1
      %p122 = scmp.eq.s32.totalorder %s21, 1
      %p123 = scmp.ne.s32.totalorder %s118, %s120
      %p124 = scmp.eq.s32.totalorder %s21, 0
      %p125 = por %p123, %p124
      %p126 = scmp.ne.s32.totalorder %s118, %s120
      %p127 = scmp.eq.s32.totalorder %s26, 1
      %p128 = por %p126, %p127
      %p129 = scmp.ne.s32.totalorder %s120, %s121
      %p130 = scmp.eq.s32.totalorder %s26, 0
      %p131 = por %p129, %p130
      %p132 = scmp.ne.s32.totalorder %s120, %s121
      %p133 = scmp.eq.s32.totalorder %s27, 1
      %p134 = por %p132, %p133
      %p136 = scmp.ne.s32.totalorder %s121, %s135
      %p137 = scmp.eq.s32.totalorder %s27, 0
      %p138 = por %p136, %p137
      %s140 = sadd.s32 %s139, 1
      %p143 = scmp.eq.s32.totalorder %s21, 1
      %p144 = scmp.ne.s32.totalorder %s139, %s141
      %p145 = scmp.eq.s32.totalorder %s21, 0
      %p146 = por %p144, %p145
      %p147 = scmp.ne.s32.totalorder %s139, %s141
      %p148 = scmp.eq.s32.totalorder %s26, 1
      %p149 = por %p147, %p148
      %p150 = scmp.ne.s32.totalorder %s141, %s142
      %p151 = scmp.eq.s32.totalorder %s26, 0
      %p152 = por %p150, %p151
      %p153 = scmp.ne.s32.totalorder %s141, %s142
      %p154 = scmp.eq.s32.totalorder %s27, 1
      %p155 = por %p153, %p154
      %p157 = scmp.ne.s32.totalorder %s142, %s156
      %p158 = scmp.eq.s32.totalorder %s27, 0
      %p159 = por %p157, %p158
      %s161 = sadd.s32 %s160, 1
      %p164 = scmp.eq.s32.totalorder %s21, 1
      %p165 = scmp.ne.s32.totalorder %s160, %s162
      %p166 = scmp.eq.s32.totalorder %s21, 0
      %p167 = por %p165, %p166
      %p168 = scmp.ne.s32.totalorder %s160, %s162
      %p169 = scmp.eq.s32.totalorder %s26, 1
      %p170 = por %p168, %p169
      %p171 = scmp.ne.s32.totalorder %s162, %s163
      %p172 = scmp.eq.s32.totalorder %s26, 0
      %p173 = por %p171, %p172
      %p174 = scmp.ne.s32.totalorder %s162, %s163
      %p175 = scmp.eq.s32.totalorder %s27, 1
      %p176 = por %p174, %p175
      %p178 = scmp.ne.s32.totalorder %s163, %s177
      %p179 = scmp.eq.s32.totalorder %s27, 0
      %p180 = por %p178, %p179
      %s181 = ssub.s32 %s21, %s28
      %p182 = scmp.eq.s32.totalorder %s181, 0
      %s184 = sadd.s32 %s183, 1
      %s185 = scalar_select %p182, %s183, %s184
      %p188 = pneg %p182
      %p189 = scmp.eq.s32.totalorder %s21, 1
      %p190 = por %p188, %p189
      %p191 = scmp.ne.s32.totalorder %s183, %s186
      %p192 = scmp.eq.s32.totalorder %s21, 0
      %p193 = por %p191, %p192
      %p194 = scmp.ne.s32.totalorder %s183, %s186
      %p195 = scmp.eq.s32.totalorder %s26, 1
      %p196 = por %p194, %p195
      %p197 = scmp.ne.s32.totalorder %s186, %s187
      %p198 = scmp.eq.s32.totalorder %s26, 0
      %p199 = por %p197, %p198
      %p200 = scmp.ne.s32.totalorder %s186, %s187
      %p201 = scmp.eq.s32.totalorder %s27, 1
      %p202 = por %p200, %p201
      %p204 = scmp.ne.s32.totalorder %s187, %s203
      %p205 = scmp.eq.s32.totalorder %s27, 0
      %p206 = por %p204, %p205
      %p207 = scmp.le.s32.totalorder 1, %s21
      %p208 = scmp.lt.s32.totalorder %s21, 3
      %p209 = pnand %p207, %p208
      %p210 = pneg %p209
      // Predicated region
      $region9: #{tpu_custom_call.1} parent=5 // pred_check
        _
      $region10: #{tpu_custom_call.1} parent=5 // pred_check_branch
        %212 = sbr.rel (%p209) target = $region12
      $region11: #{tpu_custom_call.1} parent=5 // pred_region
        %s213 = ssub.s32 %s21, 1
        // Predicated region
        $region13: #{tpu_custom_call.1} parent=11 // pred_check
          %p214 = pneg %p68
        $region14: #{tpu_custom_call.1} parent=11 // pred_check_branch
          %216 = sbr.rel (%p214) target = $region16
        $region15: #{tpu_custom_call.1} parent=11 // pred_region
          %s218 = ssub.s32 2048, 2048
          %219 = vsyncadd [#allocation6], %s218
          %s220 = sshll.u32 [#allocation5], 4
          %s221 = int_to_ptr.vmem [resolvable:$true] %s220
          %226 = dma.hbm_to_vmem [thread:$0]  %s1, 2048, %s221, [#allocation6], 128, 128, 8
        $region16: #{tpu_custom_call.1} parent=11 // pred_fallthru
          _
        // Predicated region
        $region17: #{tpu_custom_call.1} parent=11 // pred_check
          %p227 = pneg %p89
        $region18: #{tpu_custom_call.1} parent=11 // pred_check_branch
          %229 = sbr.rel (%p227) target = $region20
        $region19: #{tpu_custom_call.1} parent=11 // pred_region
          _
        $region20: #{tpu_custom_call.1} parent=11 // pred_fallthru
          _
        // Predicated region
        $region21: #{tpu_custom_call.1} parent=11 // pred_check
          %p230 = pneg %p110
        $region22: #{tpu_custom_call.1} parent=11 // pred_check_branch
          %232 = sbr.rel (%p230) target = $region24
        $region23: #{tpu_custom_call.1} parent=11 // pred_region
          %s234 = ssub.s32 2048, 2048
          %235 = vsyncadd [#allocation6], %s234
          %s236 = sshll.u32 [#allocation7], 4
          %s237 = int_to_ptr.vmem [resolvable:$true] %s236
          %242 = dma.hbm_to_vmem [thread:$0]  %s3, 2048, %s237, [#allocation6], 128, 128, 8
        $region24: #{tpu_custom_call.1} parent=11 // pred_fallthru
          _
        // Predicated region
        $region25: #{tpu_custom_call.1} parent=11 // pred_check
          %p243 = pneg %p131
        $region26: #{tpu_custom_call.1} parent=11 // pred_check_branch
          %245 = sbr.rel (%p243) target = $region28
        $region27: #{tpu_custom_call.1} parent=11 // pred_region
          _
        $region28: #{tpu_custom_call.1} parent=11 // pred_fallthru
          _
        // Predicated region
        $region29: #{tpu_custom_call.1} parent=11 // pred_check
          %p246 = pneg %p152
        $region30: #{tpu_custom_call.1} parent=11 // pred_check_branch
          %248 = sbr.rel (%p246) target = $region32
        $region31: #{tpu_custom_call.1} parent=11 // pred_region
          %s250 = ssub.s32 2048, 2048
          %251 = vsyncadd [#allocation9], %s250
          %s252 = sshll.u32 [#allocation8], 4
          %s253 = int_to_ptr.vmem [resolvable:$true] %s252
          %258 = dma.hbm_to_vmem [thread:$0]  %s5, 2048, %s253, [#allocation9], 128, 128, 8
        $region32: #{tpu_custom_call.1} parent=11 // pred_fallthru
          _
        // Predicated region
        $region33: #{tpu_custom_call.1} parent=11 // pred_check
          %p259 = pneg %p173
        $region34: #{tpu_custom_call.1} parent=11 // pred_check_branch
          %261 = sbr.rel (%p259) target = $region36
        $region35: #{tpu_custom_call.1} parent=11 // pred_region
          _
        $region36: #{tpu_custom_call.1} parent=11 // pred_fallthru
          _
      $region12: #{tpu_custom_call.1} parent=5 // pred_fallthru
        _
      %p262 = scmp.lt.s32.totalorder %s21, 2
      // Predicated region
      $region37: #{tpu_custom_call.1} parent=5 // pred_check
        %p263 = pneg %p262
      $region38: #{tpu_custom_call.1} parent=5 // pred_check_branch
        %265 = sbr.rel (%p263) target = $region40
      $region39: #{tpu_custom_call.1} parent=5 // pred_region
        // Predicated region
        $region41: #{tpu_custom_call.1} parent=39 // pred_check
          %p266 = pneg %p41
        $region42: #{tpu_custom_call.1} parent=39 // pred_check_branch
          %268 = sbr.rel (%p266) target = $region44
        $region43: #{tpu_custom_call.1} parent=39 // pred_region
          %s269 = sand.u32 %s31, 1
          %s270 = scalar_lea.sflag [#allocation3], %s269
          %s271 = sand.u32 %s31, 1
          %s272 = smul.addr %s271, 128
          %s273 = scalar_lea.vmem [#allocation2], %s272
          %s274 = smul.u32 16, %s21
          %s276 = ssub.s32 2048, 2048
          %277 = vsyncadd %s270, %s276
          %s278 = smul.addr %s274, 128
          %s279 = scalar_lea.hbm %s0, %s278
          %s280 = sshll.u32 %s273, 4
          %s281 = int_to_ptr.vmem [resolvable:$true] %s280
          %286 = dma.hbm_to_vmem [thread:$0]  %s279, 2048, %s281, %s270, 128, 128, 8
        $region44: #{tpu_custom_call.1} parent=39 // pred_fallthru
          _
      $region40: #{tpu_custom_call.1} parent=5 // pred_fallthru
        _
      %p287 = scmp.le.s32.totalorder 1, %s21
      %p288 = scmp.lt.s32.totalorder %s21, 3
      %p289 = pnand %p287, %p288
      %p290 = pneg %p289
      // Predicated region
      $region45: #{tpu_custom_call.1} parent=5 // pred_check
        _
      $region46: #{tpu_custom_call.1} parent=5 // pred_check_branch
        %292 = sbr.rel (%p289) target = $region48
      $region47: #{tpu_custom_call.1} parent=5 // pred_region
        %s293 = ssub.s32 %s21, 1
        %s294 = sand.u32 %s34, 1
        %s295 = scalar_lea.sflag [#allocation3], %s294
        %s296 = sand.u32 %s34, 1
        %s297 = smul.addr %s296, 128
        %s298 = scalar_lea.vmem [#allocation2], %s297
        // Predicated region
        $region49: #{tpu_custom_call.1} parent=47 // pred_check
          %p299 = pneg %p47
        $region50: #{tpu_custom_call.1} parent=47 // pred_check_branch
          %301 = sbr.rel (%p299) target = $region52
        $region51: #{tpu_custom_call.1} parent=47 // pred_region
          %302 = dma.done %s295, 2048
        $region52: #{tpu_custom_call.1} parent=47 // pred_fallthru
          _
        // Predicated region
        $region53: #{tpu_custom_call.1} parent=47 // pred_check
          %p303 = pneg %p68
        $region54: #{tpu_custom_call.1} parent=47 // pred_check_branch
          %305 = sbr.rel (%p303) target = $region56
        $region55: #{tpu_custom_call.1} parent=47 // pred_region
          %306 = dma.done [#allocation6], 2048
        $region56: #{tpu_custom_call.1} parent=47 // pred_fallthru
          _
        // Predicated region
        $region57: #{tpu_custom_call.1} parent=47 // pred_check
          %p307 = pneg %p110
        $region58: #{tpu_custom_call.1} parent=47 // pred_check_branch
          %309 = sbr.rel (%p307) target = $region60
        $region59: #{tpu_custom_call.1} parent=47 // pred_region
          %310 = dma.done [#allocation6], 2048
        $region60: #{tpu_custom_call.1} parent=47 // pred_fallthru
          _
        // Predicated region
        $region61: #{tpu_custom_call.1} parent=47 // pred_check
          %p311 = pneg %p152
        $region62: #{tpu_custom_call.1} parent=47 // pred_check_branch
          %313 = sbr.rel (%p311) target = $region64
        $region63: #{tpu_custom_call.1} parent=47 // pred_region
          %314 = dma.done [#allocation9], 2048
        $region64: #{tpu_custom_call.1} parent=47 // pred_fallthru
          _
        %s315 = sand.u32 %s34, 1
        %s316 = scalar_lea.sflag [#allocation3], %s315
        %s317 = sand.u32 %s34, 1
        %s318 = smul.addr %s317, 128
        %s319 = scalar_lea.vmem [#allocation2], %s318
        %p320 = pneg %p47
        %p321 = pneg %p44
        %p322 = pneg %p68
        %p323 = pneg %p65
        %p324 = pneg %p89
        %p325 = pneg %p86
        %p326 = pneg %p110
        %p327 = pneg %p107
        %p328 = pneg %p131
        %p329 = pneg %p128
        %p330 = pneg %p152
        %p331 = pneg %p149
        %p332 = pneg %p173
        %p333 = pneg %p170
        %p334 = pneg %p199
        %p335 = pneg %p196
        %s336 = sand.u32 %s186, 1
        %s337 = scalar_lea.sflag [#allocation4], %s336
        %s338 = sand.u32 %s186, 1
        %s339 = smul.addr %s338, 128
        %s340 = scalar_lea.vmem [#allocation10], %s339
        %s341 = smul.u32 16, %s26
        %s342 = smul.u32 16, %s26
        %v343 = vld [vmem:[%s298] sm:$0xff]
        %v344 = vld [vmem:[%s298 + $0x8] sm:$0xff]
        %v345 = vld [vmem:[%s298 + $0x10] sm:$0xff]
        %v346 = vld [vmem:[%s298 + $0x18] sm:$0xff]
        %v347 = vld [vmem:[%s298 + $0x20] sm:$0xff]
        %v348 = vld [vmem:[%s298 + $0x28] sm:$0xff]
        %v349 = vld [vmem:[%s298 + $0x30] sm:$0xff]
        %v350 = vld [vmem:[%s298 + $0x38] sm:$0xff]
        %v351 = vld [vmem:[%s298 + $0x40] sm:$0xff]
        %v352 = vld [vmem:[%s298 + $0x48] sm:$0xff]
        %v353 = vld [vmem:[%s298 + $0x50] sm:$0xff]
        %v354 = vld [vmem:[%s298 + $0x58] sm:$0xff]
        %v355 = vld [vmem:[%s298 + $0x60] sm:$0xff]
        %v356 = vld [vmem:[%s298 + $0x68] sm:$0xff]
        %v357 = vld [vmem:[%s298 + $0x70] sm:$0xff]
        %v358 = vld [vmem:[%s298 + $0x78] sm:$0xff]
        %v359 = vld [vmem:[#allocation5] sm:$0xff]
        %v360 = vld [vmem:[#allocation5 + $0x8] sm:$0xff]
        %v361 = vld [vmem:[#allocation5 + $0x10] sm:$0xff]
        %v362 = vld [vmem:[#allocation5 + $0x18] sm:$0xff]
        %v363 = vld [vmem:[#allocation5 + $0x20] sm:$0xff]
        %v364 = vld [vmem:[#allocation5 + $0x28] sm:$0xff]
        %v365 = vld [vmem:[#allocation5 + $0x30] sm:$0xff]
        %v366 = vld [vmem:[#allocation5 + $0x38] sm:$0xff]
        %v367 = vld [vmem:[#allocation5 + $0x40] sm:$0xff]
        %v368 = vld [vmem:[#allocation5 + $0x48] sm:$0xff]
        %v369 = vld [vmem:[#allocation5 + $0x50] sm:$0xff]
        %v370 = vld [vmem:[#allocation5 + $0x58] sm:$0xff]
        %v371 = vld [vmem:[#allocation5 + $0x60] sm:$0xff]
        %v372 = vld [vmem:[#allocation5 + $0x68] sm:$0xff]
        %v373 = vld [vmem:[#allocation5 + $0x70] sm:$0xff]
        %v374 = vld [vmem:[#allocation5 + $0x78] sm:$0xff]
        %v375 = vld [vmem:[%s2] sm:$0x1]
        %v377 = vlaneseq
        %v378 = vshrl.u32 %v377, 7
        %v379 = vsub.s32 0, %v378
        %v380 = vrot.slane %v375, %v379
        %382 = vmatprep.subr.mxu0 0.0
        %383 = vmatpush1.msra.mxu0 %v359
        %384 = vmatprep.subr.mxu0 0.0
        %385 = vmatpush1.msra.mxu0 %v360
        %386 = vmatprep.subr.mxu0 0.0
        %387 = vmatpush1.msra.mxu0 %v361
        %388 = vmatprep.subr.mxu0 0.0
        %389 = vmatpush1.msra.mxu0 %v362
        %390 = vmatprep.subr.mxu0 0.0
        %391 = vmatpush1.msra.mxu0 %v363
        %392 = vmatprep.subr.mxu0 0.0
        %393 = vmatpush1.msra.mxu0 %v364
        %394 = vmatprep.subr.mxu0 0.0
        %395 = vmatpush1.msra.mxu0 %v365
        %396 = vmatprep.subr.mxu0 0.0
        %397 = vmatpush1.msra.mxu0 %v366
        %398 = vmatprep.subr.mxu0 0.0
        %399 = vmatpush1.msra.mxu0 %v367
        %400 = vmatprep.subr.mxu0 0.0
        %401 = vmatpush1.msra.mxu0 %v368
        %402 = vmatprep.subr.mxu0 0.0
        %403 = vmatpush1.msra.mxu0 %v369
        %404 = vmatprep.subr.mxu0 0.0
        %405 = vmatpush1.msra.mxu0 %v370
        %406 = vmatprep.subr.mxu0 0.0
        %407 = vmatpush1.msra.mxu0 %v371
        %408 = vmatprep.subr.mxu0 0.0
        %409 = vmatpush1.msra.mxu0 %v372
        %410 = vmatprep.subr.mxu0 0.0
        %411 = vmatpush1.msra.mxu0 %v373
        %412 = vmatprep.subr.mxu0 0.0
        %413 = vmatpush1.msra.mxu0 %v374
        %414 = vmatprep.subr.mxu0 0.0
        %415 = vmatpush1.msra.mxu0 0.0
        %416 = vmatprep.subr.mxu0 0.0
        %417 = vmatpush1.msra.mxu0 0.0
        %418 = vmatprep.subr.mxu0 0.0
        %419 = vmatpush1.msra.mxu0 0.0
        %420 = vmatprep.subr.mxu0 0.0
        %421 = vmatpush1.msra.mxu0 0.0
        %422 = vmatprep.subr.mxu0 0.0
        %423 = vmatpush1.msra.mxu0 0.0
        %424 = vmatprep.subr.mxu0 0.0
        %425 = vmatpush1.msra.mxu0 0.0
        %426 = vmatprep.subr.mxu0 0.0
        %427 = vmatpush1.msra.mxu0 0.0
        %428 = vmatprep.subr.mxu0 0.0
        %429 = vmatpush1.msra.mxu0 0.0
        %430 = vmatprep.subr.mxu0 0.0
        %431 = vmatpush1.msra.mxu0 0.0
        %432 = vmatprep.subr.mxu0 0.0
        %433 = vmatpush1.msra.mxu0 0.0
        %434 = vmatprep.subr.mxu0 0.0
        %435 = vmatpush1.msra.mxu0 0.0
        %436 = vmatprep.subr.mxu0 0.0
        %437 = vmatpush1.msra.mxu0 0.0
        %438 = vmatprep.subr.mxu0 0.0
        %439 = vmatpush1.msra.mxu0 0.0
        %440 = vmatprep.subr.mxu0 0.0
        %441 = vmatpush1.msra.mxu0 0.0
        %442 = vmatprep.subr.mxu0 0.0
        %443 = vmatpush1.msra.mxu0 0.0
        %444 = vmatprep.subr.mxu0 0.0
        %445 = vmatpush1.msra.mxu0 0.0
        %446 = vmatprep.mubr.f32.mxu0 0.0
        %447 = vmatmul.mubr.f32.gmra.mrb[0].mxu0 %v343
        %v448 = vpop.f32.mrb[0].mxu0
        %v449 = vadd.f32 %v380, %v448
        %v450 = vpop.f32.mrb[0].mxu0
        %451 = vmatprep.mubr.f32.mxu0 0.0
        %452 = vmatmul.mubr.f32.gmra.mrb[0].mxu0 %v344
        %v453 = vpop.f32.mrb[0].mxu0
        %v454 = vadd.f32 %v380, %v453
        %v455 = vpop.f32.mrb[0].mxu0
        %456 = vmatprep.mubr.f32.mxu0 0.0
        %457 = vmatmul.mubr.f32.gmra.mrb[0].mxu0 %v345
        %v458 = vpop.f32.mrb[0].mxu0
        %v459 = vadd.f32 %v380, %v458
        %v460 = vpop.f32.mrb[0].mxu0
        %461 = vmatprep.mubr.f32.mxu0 0.0
        %462 = vmatmul.mubr.f32.gmra.mrb[0].mxu0 %v346
        %v463 = vpop.f32.mrb[0].mxu0
        %v464 = vadd.f32 %v380, %v463
        %v465 = vpop.f32.mrb[0].mxu0
        %466 = vmatprep.mubr.f32.mxu0 0.0
        %467 = vmatmul.mubr.f32.gmra.mrb[0].mxu0 %v347
        %v468 = vpop.f32.mrb[0].mxu0
        %v469 = vadd.f32 %v380, %v468
        %v470 = vpop.f32.mrb[0].mxu0
        %471 = vmatprep.mubr.f32.mxu0 0.0
        %472 = vmatmul.mubr.f32.gmra.mrb[0].mxu0 %v348
        %v473 = vpop.f32.mrb[0].mxu0
        %v474 = vadd.f32 %v380, %v473
        %v475 = vpop.f32.mrb[0].mxu0
        %476 = vmatprep.mubr.f32.mxu0 0.0
        %477 = vmatmul.mubr.f32.gmra.mrb[0].mxu0 %v349
        %v478 = vpop.f32.mrb[0].mxu0
        %v479 = vadd.f32 %v380, %v478
        %v480 = vpop.f32.mrb[0].mxu0
        %481 = vmatprep.mubr.f32.mxu0 0.0
        %482 = vmatmul.mubr.f32.gmra.mrb[0].mxu0 %v350
        %v483 = vpop.f32.mrb[0].mxu0
        %v484 = vadd.f32 %v380, %v483
        %v485 = vpop.f32.mrb[0].mxu0
        %486 = vmatprep.mubr.f32.mxu0 0.0
        %487 = vmatmul.mubr.f32.gmra.mrb[0].mxu0 %v351
        %v488 = vpop.f32.mrb[0].mxu0
        %v489 = vadd.f32 %v380, %v488
        %v490 = vpop.f32.mrb[0].mxu0
        %491 = vmatprep.mubr.f32.mxu0 0.0
        %492 = vmatmul.mubr.f32.gmra.mrb[0].mxu0 %v352
        %v493 = vpop.f32.mrb[0].mxu0
        %v494 = vadd.f32 %v380, %v493
        %v495 = vpop.f32.mrb[0].mxu0
        %496 = vmatprep.mubr.f32.mxu0 0.0
        %497 = vmatmul.mubr.f32.gmra.mrb[0].mxu0 %v353
        %v498 = vpop.f32.mrb[0].mxu0
        %v499 = vadd.f32 %v380, %v498
        %v500 = vpop.f32.mrb[0].mxu0
        %501 = vmatprep.mubr.f32.mxu0 0.0
        %502 = vmatmul.mubr.f32.gmra.mrb[0].mxu0 %v354
        %v503 = vpop.f32.mrb[0].mxu0
        %v504 = vadd.f32 %v380, %v503
        %v505 = vpop.f32.mrb[0].mxu0
        %506 = vmatprep.mubr.f32.mxu0 0.0
        %507 = vmatmul.mubr.f32.gmra.mrb[0].mxu0 %v355
        %v508 = vpop.f32.mrb[0].mxu0
        %v509 = vadd.f32 %v380, %v508
        %v510 = vpop.f32.mrb[0].mxu0
        %511 = vmatprep.mubr.f32.mxu0 0.0
        %512 = vmatmul.mubr.f32.gmra.mrb[0].mxu0 %v356
        %v513 = vpop.f32.mrb[0].mxu0
        %v514 = vadd.f32 %v380, %v513
        %v515 = vpop.f32.mrb[0].mxu0
        %516 = vmatprep.mubr.f32.mxu0 0.0
        %517 = vmatmul.mubr.f32.gmra.mrb[0].mxu0 %v357
        %v518 = vpop.f32.mrb[0].mxu0
        %v519 = vadd.f32 %v380, %v518
        %v520 = vpop.f32.mrb[0].mxu0
        %521 = vmatprep.mubr.f32.mxu0 0.0
        %522 = vmatmul.mubr.f32.gmra.mrb[0].mxu0 %v358
        %v523 = vpop.f32.mrb[0].mxu0
        %v524 = vadd.f32 %v380, %v523
        %v525 = vpop.f32.mrb[0].mxu0
        %526 = vdwg.mxu0
        %v527 = vmul.f32 %v449, 0.01
        %v528 = vmul.f32 %v454, 0.01
        %v529 = vmul.f32 %v459, 0.01
        %v530 = vmul.f32 %v464, 0.01
        %v531 = vmul.f32 %v469, 0.01
        %v532 = vmul.f32 %v474, 0.01
        %v533 = vmul.f32 %v479, 0.01
        %v534 = vmul.f32 %v484, 0.01
        %v535 = vmul.f32 %v489, 0.01
        %v536 = vmul.f32 %v494, 0.01
        %v537 = vmul.f32 %v499, 0.01
        %v538 = vmul.f32 %v504, 0.01
        %v539 = vmul.f32 %v509, 0.01
        %v540 = vmul.f32 %v514, 0.01
        %v541 = vmul.f32 %v519, 0.01
        %v542 = vmul.f32 %v524, 0.01
        %v543 = vmax.f32 %v449, %v527
        %v544 = vmax.f32 %v454, %v528
        %v545 = vmax.f32 %v459, %v529
        %v546 = vmax.f32 %v464, %v530
        %v547 = vmax.f32 %v469, %v531
        %v548 = vmax.f32 %v474, %v532
        %v549 = vmax.f32 %v479, %v533
        %v550 = vmax.f32 %v484, %v534
        %v551 = vmax.f32 %v489, %v535
        %v552 = vmax.f32 %v494, %v536
        %v553 = vmax.f32 %v499, %v537
        %v554 = vmax.f32 %v504, %v538
        %v555 = vmax.f32 %v509, %v539
        %v556 = vmax.f32 %v514, %v540
        %v557 = vmax.f32 %v519, %v541
        %v558 = vmax.f32 %v524, %v542
        %v559 = vld [vmem:[#allocation7] sm:$0xff]
        %v560 = vld [vmem:[#allocation7 + $0x8] sm:$0xff]
        %v561 = vld [vmem:[#allocation7 + $0x10] sm:$0xff]
        %v562 = vld [vmem:[#allocation7 + $0x18] sm:$0xff]
        %v563 = vld [vmem:[#allocation7 + $0x20] sm:$0xff]
        %v564 = vld [vmem:[#allocation7 + $0x28] sm:$0xff]
        %v565 = vld [vmem:[#allocation7 + $0x30] sm:$0xff]
        %v566 = vld [vmem:[#allocation7 + $0x38] sm:$0xff]
        %v567 = vld [vmem:[#allocation7 + $0x40] sm:$0xff]
        %v568 = vld [vmem:[#allocation7 + $0x48] sm:$0xff]
        %v569 = vld [vmem:[#allocation7 + $0x50] sm:$0xff]
        %v570 = vld [vmem:[#allocation7 + $0x58] sm:$0xff]
        %v571 = vld [vmem:[#allocation7 + $0x60] sm:$0xff]
        %v572 = vld [vmem:[#allocation7 + $0x68] sm:$0xff]
        %v573 = vld [vmem:[#allocation7 + $0x70] sm:$0xff]
        %v574 = vld [vmem:[#allocation7 + $0x78] sm:$0xff]
        %v575 = vld [vmem:[%s4] sm:$0x1]
        %v577 = vlaneseq
        %v578 = vshrl.u32 %v577, 7
        %v579 = vsub.s32 0, %v578
        %v580 = vrot.slane %v575, %v579
        %582 = vmatprep.subr.mxu0 0.0
        %583 = vmatpush1.msra.mxu0 %v559
        %584 = vmatprep.subr.mxu0 0.0
        %585 = vmatpush1.msra.mxu0 %v560
        %586 = vmatprep.subr.mxu0 0.0
        %587 = vmatpush1.msra.mxu0 %v561
        %588 = vmatprep.subr.mxu0 0.0
        %589 = vmatpush1.msra.mxu0 %v562
        %590 = vmatprep.subr.mxu0 0.0
        %591 = vmatpush1.msra.mxu0 %v563
        %592 = vmatprep.subr.mxu0 0.0
        %593 = vmatpush1.msra.mxu0 %v564
        %594 = vmatprep.subr.mxu0 0.0
        %595 = vmatpush1.msra.mxu0 %v565
        %596 = vmatprep.subr.mxu0 0.0
        %597 = vmatpush1.msra.mxu0 %v566
        %598 = vmatprep.subr.mxu0 0.0
        %599 = vmatpush1.msra.mxu0 %v567
        %600 = vmatprep.subr.mxu0 0.0
        %601 = vmatpush1.msra.mxu0 %v568
        %602 = vmatprep.subr.mxu0 0.0
        %603 = vmatpush1.msra.mxu0 %v569
        %604 = vmatprep.subr.mxu0 0.0
        %605 = vmatpush1.msra.mxu0 %v570
        %606 = vmatprep.subr.mxu0 0.0
        %607 = vmatpush1.msra.mxu0 %v571
        %608 = vmatprep.subr.mxu0 0.0
        %609 = vmatpush1.msra.mxu0 %v572
        %610 = vmatprep.subr.mxu0 0.0
        %611 = vmatpush1.msra.mxu0 %v573
        %612 = vmatprep.subr.mxu0 0.0
        %613 = vmatpush1.msra.mxu0 %v574
        %614 = vmatprep.subr.mxu0 0.0
        %615 = vmatpush1.msra.mxu0 0.0
        %616 = vmatprep.subr.mxu0 0.0
        %617 = vmatpush1.msra.mxu0 0.0
        %618 = vmatprep.subr.mxu0 0.0
        %619 = vmatpush1.msra.mxu0 0.0
        %620 = vmatprep.subr.mxu0 0.0
        %621 = vmatpush1.msra.mxu0 0.0
        %622 = vmatprep.subr.mxu0 0.0
        %623 = vmatpush1.msra.mxu0 0.0
        %624 = vmatprep.subr.mxu0 0.0
        %625 = vmatpush1.msra.mxu0 0.0
        %626 = vmatprep.subr.mxu0 0.0
        %627 = vmatpush1.msra.mxu0 0.0
        %628 = vmatprep.subr.mxu0 0.0
        %629 = vmatpush1.msra.mxu0 0.0
        %630 = vmatprep.subr.mxu0 0.0
        %631 = vmatpush1.msra.mxu0 0.0
        %632 = vmatprep.subr.mxu0 0.0
        %633 = vmatpush1.msra.mxu0 0.0
        %634 = vmatprep.subr.mxu0 0.0
        %635 = vmatpush1.msra.mxu0 0.0
        %636 = vmatprep.subr.mxu0 0.0
        %637 = vmatpush1.msra.mxu0 0.0
        %638 = vmatprep.subr.mxu0 0.0
        %639 = vmatpush1.msra.mxu0 0.0
        %640 = vmatprep.subr.mxu0 0.0
        %641 = vmatpush1.msra.mxu0 0.0
        %642 = vmatprep.subr.mxu0 0.0
        %643 = vmatpush1.msra.mxu0 0.0
        %644 = vmatprep.subr.mxu0 0.0
        %645 = vmatpush1.msra.mxu0 0.0
        %646 = vmatprep.mubr.f32.mxu0 0.0
        %647 = vmatmul.mubr.f32.gmra.mrb[0].mxu0 %v543
        %v648 = vpop.f32.mrb[0].mxu0
        %v649 = vadd.f32 %v580, %v648
        %v650 = vpop.f32.mrb[0].mxu0
        %651 = vmatprep.mubr.f32.mxu0 0.0
        %652 = vmatmul.mubr.f32.gmra.mrb[0].mxu0 %v544
        %v653 = vpop.f32.mrb[0].mxu0
        %v654 = vadd.f32 %v580, %v653
        %v655 = vpop.f32.mrb[0].mxu0
        %656 = vmatprep.mubr.f32.mxu0 0.0
        %657 = vmatmul.mubr.f32.gmra.mrb[0].mxu0 %v545
        %v658 = vpop.f32.mrb[0].mxu0
        %v659 = vadd.f32 %v580, %v658
        %v660 = vpop.f32.mrb[0].mxu0
        %661 = vmatprep.mubr.f32.mxu0 0.0
        %662 = vmatmul.mubr.f32.gmra.mrb[0].mxu0 %v546
        %v663 = vpop.f32.mrb[0].mxu0
        %v664 = vadd.f32 %v580, %v663
        %v665 = vpop.f32.mrb[0].mxu0
        %666 = vmatprep.mubr.f32.mxu0 0.0
        %667 = vmatmul.mubr.f32.gmra.mrb[0].mxu0 %v547
        %v668 = vpop.f32.mrb[0].mxu0
        %v669 = vadd.f32 %v580, %v668
        %v670 = vpop.f32.mrb[0].mxu0
        %671 = vmatprep.mubr.f32.mxu0 0.0
        %672 = vmatmul.mubr.f32.gmra.mrb[0].mxu0 %v548
        %v673 = vpop.f32.mrb[0].mxu0
        %v674 = vadd.f32 %v580, %v673
        %v675 = vpop.f32.mrb[0].mxu0
        %676 = vmatprep.mubr.f32.mxu0 0.0
        %677 = vmatmul.mubr.f32.gmra.mrb[0].mxu0 %v549
        %v678 = vpop.f32.mrb[0].mxu0
        %v679 = vadd.f32 %v580, %v678
        %v680 = vpop.f32.mrb[0].mxu0
        %681 = vmatprep.mubr.f32.mxu0 0.0
        %682 = vmatmul.mubr.f32.gmra.mrb[0].mxu0 %v550
        %v683 = vpop.f32.mrb[0].mxu0
        %v684 = vadd.f32 %v580, %v683
        %v685 = vpop.f32.mrb[0].mxu0
        %686 = vmatprep.mubr.f32.mxu0 0.0
        %687 = vmatmul.mubr.f32.gmra.mrb[0].mxu0 %v551
        %v688 = vpop.f32.mrb[0].mxu0
        %v689 = vadd.f32 %v580, %v688
        %v690 = vpop.f32.mrb[0].mxu0
        %691 = vmatprep.mubr.f32.mxu0 0.0
        %692 = vmatmul.mubr.f32.gmra.mrb[0].mxu0 %v552
        %v693 = vpop.f32.mrb[0].mxu0
        %v694 = vadd.f32 %v580, %v693
        %v695 = vpop.f32.mrb[0].mxu0
        %696 = vmatprep.mubr.f32.mxu0 0.0
        %697 = vmatmul.mubr.f32.gmra.mrb[0].mxu0 %v553
        %v698 = vpop.f32.mrb[0].mxu0
        %v699 = vadd.f32 %v580, %v698
        %v700 = vpop.f32.mrb[0].mxu0
        %701 = vmatprep.mubr.f32.mxu0 0.0
        %702 = vmatmul.mubr.f32.gmra.mrb[0].mxu0 %v554
        %v703 = vpop.f32.mrb[0].mxu0
        %v704 = vadd.f32 %v580, %v703
        %v705 = vpop.f32.mrb[0].mxu0
        %706 = vmatprep.mubr.f32.mxu0 0.0
        %707 = vmatmul.mubr.f32.gmra.mrb[0].mxu0 %v555
        %v708 = vpop.f32.mrb[0].mxu0
        %v709 = vadd.f32 %v580, %v708
        %v710 = vpop.f32.mrb[0].mxu0
        %711 = vmatprep.mubr.f32.mxu0 0.0
        %712 = vmatmul.mubr.f32.gmra.mrb[0].mxu0 %v556
        %v713 = vpop.f32.mrb[0].mxu0
        %v714 = vadd.f32 %v580, %v713
        %v715 = vpop.f32.mrb[0].mxu0
        %716 = vmatprep.mubr.f32.mxu0 0.0
        %717 = vmatmul.mubr.f32.gmra.mrb[0].mxu0 %v557
        %v718 = vpop.f32.mrb[0].mxu0
        %v719 = vadd.f32 %v580, %v718
        %v720 = vpop.f32.mrb[0].mxu0
        %721 = vmatprep.mubr.f32.mxu0 0.0
        %722 = vmatmul.mubr.f32.gmra.mrb[0].mxu0 %v558
        %v723 = vpop.f32.mrb[0].mxu0
        %v724 = vadd.f32 %v580, %v723
        %v725 = vpop.f32.mrb[0].mxu0
        %726 = vdwg.mxu0
        %v727 = vmul.f32 %v649, 0.01
        %v728 = vmul.f32 %v654, 0.01
        %v729 = vmul.f32 %v659, 0.01
        %v730 = vmul.f32 %v664, 0.01
        %v731 = vmul.f32 %v669, 0.01
        %v732 = vmul.f32 %v674, 0.01
        %v733 = vmul.f32 %v679, 0.01
        %v734 = vmul.f32 %v684, 0.01
        %v735 = vmul.f32 %v689, 0.01
        %v736 = vmul.f32 %v694, 0.01
        %v737 = vmul.f32 %v699, 0.01
        %v738 = vmul.f32 %v704, 0.01
        %v739 = vmul.f32 %v709, 0.01
        %v740 = vmul.f32 %v714, 0.01
        %v741 = vmul.f32 %v719, 0.01
        %v742 = vmul.f32 %v724, 0.01
        %v743 = vmax.f32 %v649, %v727
        %v744 = vmax.f32 %v654, %v728
        %v745 = vmax.f32 %v659, %v729
        %v746 = vmax.f32 %v664, %v730
        %v747 = vmax.f32 %v669, %v731
        %v748 = vmax.f32 %v674, %v732
        %v749 = vmax.f32 %v679, %v733
        %v750 = vmax.f32 %v684, %v734
        %v751 = vmax.f32 %v689, %v735
        %v752 = vmax.f32 %v694, %v736
        %v753 = vmax.f32 %v699, %v737
        %v754 = vmax.f32 %v704, %v738
        %v755 = vmax.f32 %v709, %v739
        %v756 = vmax.f32 %v714, %v740
        %v757 = vmax.f32 %v719, %v741
        %v758 = vmax.f32 %v724, %v742
        %v759 = vld [vmem:[#allocation8] sm:$0xff]
        %v760 = vld [vmem:[#allocation8 + $0x8] sm:$0xff]
        %v761 = vld [vmem:[#allocation8 + $0x10] sm:$0xff]
        %v762 = vld [vmem:[#allocation8 + $0x18] sm:$0xff]
        %v763 = vld [vmem:[#allocation8 + $0x20] sm:$0xff]
        %v764 = vld [vmem:[#allocation8 + $0x28] sm:$0xff]
        %v765 = vld [vmem:[#allocation8 + $0x30] sm:$0xff]
        %v766 = vld [vmem:[#allocation8 + $0x38] sm:$0xff]
        %v767 = vld [vmem:[#allocation8 + $0x40] sm:$0xff]
        %v768 = vld [vmem:[#allocation8 + $0x48] sm:$0xff]
        %v769 = vld [vmem:[#allocation8 + $0x50] sm:$0xff]
        %v770 = vld [vmem:[#allocation8 + $0x58] sm:$0xff]
        %v771 = vld [vmem:[#allocation8 + $0x60] sm:$0xff]
        %v772 = vld [vmem:[#allocation8 + $0x68] sm:$0xff]
        %v773 = vld [vmem:[#allocation8 + $0x70] sm:$0xff]
        %v774 = vld [vmem:[#allocation8 + $0x78] sm:$0xff]
        %v775 = vld [vmem:[%s6] sm:$0x1]
        %v777 = vlaneseq
        %v778 = vshrl.u32 %v777, 7
        %v779 = vsub.s32 0, %v778
        %v780 = vrot.slane %v775, %v779
        %782 = vmatprep.subr.mxu0 0.0
        %783 = vmatpush1.msra.mxu0 %v759
        %784 = vmatprep.subr.mxu0 0.0
        %785 = vmatpush1.msra.mxu0 %v760
        %786 = vmatprep.subr.mxu0 0.0
        %787 = vmatpush1.msra.mxu0 %v761
        %788 = vmatprep.subr.mxu0 0.0
        %789 = vmatpush1.msra.mxu0 %v762
        %790 = vmatprep.subr.mxu0 0.0
        %791 = vmatpush1.msra.mxu0 %v763
        %792 = vmatprep.subr.mxu0 0.0
        %793 = vmatpush1.msra.mxu0 %v764
        %794 = vmatprep.subr.mxu0 0.0
        %795 = vmatpush1.msra.mxu0 %v765
        %796 = vmatprep.subr.mxu0 0.0
        %797 = vmatpush1.msra.mxu0 %v766
        %798 = vmatprep.subr.mxu0 0.0
        %799 = vmatpush1.msra.mxu0 %v767
        %800 = vmatprep.subr.mxu0 0.0
        %801 = vmatpush1.msra.mxu0 %v768
        %802 = vmatprep.subr.mxu0 0.0
        %803 = vmatpush1.msra.mxu0 %v769
        %804 = vmatprep.subr.mxu0 0.0
        %805 = vmatpush1.msra.mxu0 %v770
        %806 = vmatprep.subr.mxu0 0.0
        %807 = vmatpush1.msra.mxu0 %v771
        %808 = vmatprep.subr.mxu0 0.0
        %809 = vmatpush1.msra.mxu0 %v772
        %810 = vmatprep.subr.mxu0 0.0
        %811 = vmatpush1.msra.mxu0 %v773
        %812 = vmatprep.subr.mxu0 0.0
        %813 = vmatpush1.msra.mxu0 %v774
        %814 = vmatprep.subr.mxu0 0.0
        %815 = vmatpush1.msra.mxu0 0.0
        %816 = vmatprep.subr.mxu0 0.0
        %817 = vmatpush1.msra.mxu0 0.0
        %818 = vmatprep.subr.mxu0 0.0
        %819 = vmatpush1.msra.mxu0 0.0
        %820 = vmatprep.subr.mxu0 0.0
        %821 = vmatpush1.msra.mxu0 0.0
        %822 = vmatprep.subr.mxu0 0.0
        %823 = vmatpush1.msra.mxu0 0.0
        %824 = vmatprep.subr.mxu0 0.0
        %825 = vmatpush1.msra.mxu0 0.0
        %826 = vmatprep.subr.mxu0 0.0
        %827 = vmatpush1.msra.mxu0 0.0
        %828 = vmatprep.subr.mxu0 0.0
        %829 = vmatpush1.msra.mxu0 0.0
        %830 = vmatprep.subr.mxu0 0.0
        %831 = vmatpush1.msra.mxu0 0.0
        %832 = vmatprep.subr.mxu0 0.0
        %833 = vmatpush1.msra.mxu0 0.0
        %834 = vmatprep.subr.mxu0 0.0
        %835 = vmatpush1.msra.mxu0 0.0
        %836 = vmatprep.subr.mxu0 0.0
        %837 = vmatpush1.msra.mxu0 0.0
        %838 = vmatprep.subr.mxu0 0.0
        %839 = vmatpush1.msra.mxu0 0.0
        %840 = vmatprep.subr.mxu0 0.0
        %841 = vmatpush1.msra.mxu0 0.0
        %842 = vmatprep.subr.mxu0 0.0
        %843 = vmatpush1.msra.mxu0 0.0
        %844 = vmatprep.subr.mxu0 0.0
        %845 = vmatpush1.msra.mxu0 0.0
        %846 = vmatprep.mubr.f32.mxu0 0.0
        %847 = vmatmul.mubr.f32.gmra.mrb[0].mxu0 %v743
        %v848 = vpop.f32.mrb[0].mxu0
        %v849 = vadd.f32 %v780, %v848
        %v850 = vpop.f32.mrb[0].mxu0
        %851 = vmatprep.mubr.f32.mxu0 0.0
        %852 = vmatmul.mubr.f32.gmra.mrb[0].mxu0 %v744
        %v853 = vpop.f32.mrb[0].mxu0
        %v854 = vadd.f32 %v780, %v853
        %v855 = vpop.f32.mrb[0].mxu0
        %856 = vmatprep.mubr.f32.mxu0 0.0
        %857 = vmatmul.mubr.f32.gmra.mrb[0].mxu0 %v745
        %v858 = vpop.f32.mrb[0].mxu0
        %v859 = vadd.f32 %v780, %v858
        %v860 = vpop.f32.mrb[0].mxu0
        %861 = vmatprep.mubr.f32.mxu0 0.0
        %862 = vmatmul.mubr.f32.gmra.mrb[0].mxu0 %v746
        %v863 = vpop.f32.mrb[0].mxu0
        %v864 = vadd.f32 %v780, %v863
        %v865 = vpop.f32.mrb[0].mxu0
        %866 = vmatprep.mubr.f32.mxu0 0.0
        %867 = vmatmul.mubr.f32.gmra.mrb[0].mxu0 %v747
        %v868 = vpop.f32.mrb[0].mxu0
        %v869 = vadd.f32 %v780, %v868
        %v870 = vpop.f32.mrb[0].mxu0
        %871 = vmatprep.mubr.f32.mxu0 0.0
        %872 = vmatmul.mubr.f32.gmra.mrb[0].mxu0 %v748
        %v873 = vpop.f32.mrb[0].mxu0
        %v874 = vadd.f32 %v780, %v873
        %v875 = vpop.f32.mrb[0].mxu0
        %876 = vmatprep.mubr.f32.mxu0 0.0
        %877 = vmatmul.mubr.f32.gmra.mrb[0].mxu0 %v749
        %v878 = vpop.f32.mrb[0].mxu0
        %v879 = vadd.f32 %v780, %v878
        %v880 = vpop.f32.mrb[0].mxu0
        %881 = vmatprep.mubr.f32.mxu0 0.0
        %882 = vmatmul.mubr.f32.gmra.mrb[0].mxu0 %v750
        %v883 = vpop.f32.mrb[0].mxu0
        %v884 = vadd.f32 %v780, %v883
        %v885 = vpop.f32.mrb[0].mxu0
        %886 = vmatprep.mubr.f32.mxu0 0.0
        %887 = vmatmul.mubr.f32.gmra.mrb[0].mxu0 %v751
        %v888 = vpop.f32.mrb[0].mxu0
        %v889 = vadd.f32 %v780, %v888
        %v890 = vpop.f32.mrb[0].mxu0
        %891 = vmatprep.mubr.f32.mxu0 0.0
        %892 = vmatmul.mubr.f32.gmra.mrb[0].mxu0 %v752
        %v893 = vpop.f32.mrb[0].mxu0
        %v894 = vadd.f32 %v780, %v893
        %v895 = vpop.f32.mrb[0].mxu0
        %896 = vmatprep.mubr.f32.mxu0 0.0
        %897 = vmatmul.mubr.f32.gmra.mrb[0].mxu0 %v753
        %v898 = vpop.f32.mrb[0].mxu0
        %v899 = vadd.f32 %v780, %v898
        %v900 = vpop.f32.mrb[0].mxu0
        %901 = vmatprep.mubr.f32.mxu0 0.0
        %902 = vmatmul.mubr.f32.gmra.mrb[0].mxu0 %v754
        %v903 = vpop.f32.mrb[0].mxu0
        %v904 = vadd.f32 %v780, %v903
        %v905 = vpop.f32.mrb[0].mxu0
        %906 = vmatprep.mubr.f32.mxu0 0.0
        %907 = vmatmul.mubr.f32.gmra.mrb[0].mxu0 %v755
        %v908 = vpop.f32.mrb[0].mxu0
        %v909 = vadd.f32 %v780, %v908
        %v910 = vpop.f32.mrb[0].mxu0
        %911 = vmatprep.mubr.f32.mxu0 0.0
        %912 = vmatmul.mubr.f32.gmra.mrb[0].mxu0 %v756
        %v913 = vpop.f32.mrb[0].mxu0
        %v914 = vadd.f32 %v780, %v913
        %v915 = vpop.f32.mrb[0].mxu0
        %916 = vmatprep.mubr.f32.mxu0 0.0
        %917 = vmatmul.mubr.f32.gmra.mrb[0].mxu0 %v757
        %v918 = vpop.f32.mrb[0].mxu0
        %v919 = vadd.f32 %v780, %v918
        %v920 = vpop.f32.mrb[0].mxu0
        %921 = vmatprep.mubr.f32.mxu0 0.0
        %922 = vmatmul.mubr.f32.gmra.mrb[0].mxu0 %v758
        %v923 = vpop.f32.mrb[0].mxu0
        %v924 = vadd.f32 %v780, %v923
        %v925 = vpop.f32.mrb[0].mxu0
        %926 = vdwg.mxu0
        %927 = vst [vmem:[%s340] sm:$0xff] %v849
        %928 = vst [vmem:[%s340 + $0x8] sm:$0xff] %v854
        %929 = vst [vmem:[%s340 + $0x10] sm:$0xff] %v859
        %930 = vst [vmem:[%s340 + $0x18] sm:$0xff] %v864
        %931 = vst [vmem:[%s340 + $0x20] sm:$0xff] %v869
        %932 = vst [vmem:[%s340 + $0x28] sm:$0xff] %v874
        %933 = vst [vmem:[%s340 + $0x30] sm:$0xff] %v879
        %934 = vst [vmem:[%s340 + $0x38] sm:$0xff] %v884
        %935 = vst [vmem:[%s340 + $0x40] sm:$0xff] %v889
        %936 = vst [vmem:[%s340 + $0x48] sm:$0xff] %v894
        %937 = vst [vmem:[%s340 + $0x50] sm:$0xff] %v899
        %938 = vst [vmem:[%s340 + $0x58] sm:$0xff] %v904
        %939 = vst [vmem:[%s340 + $0x60] sm:$0xff] %v909
        %940 = vst [vmem:[%s340 + $0x68] sm:$0xff] %v914
        %941 = vst [vmem:[%s340 + $0x70] sm:$0xff] %v919
        %942 = vst [vmem:[%s340 + $0x78] sm:$0xff] %v924
        %s943 = sand.u32 %s186, 1
        %s944 = scalar_lea.sflag [#allocation4], %s943
        %s945 = sand.u32 %s186, 1
        %s946 = smul.addr %s945, 128
        %s947 = scalar_lea.vmem [#allocation10], %s946
        // Predicated region
        $region65: #{tpu_custom_call.1} parent=47 // pred_check
          %p948 = pneg %p196
        $region66: #{tpu_custom_call.1} parent=47 // pred_check_branch
          %950 = sbr.rel (%p948) target = $region68
        $region67: #{tpu_custom_call.1} parent=47 // pred_region
          %s951 = smul.u32 16, %s26
          %s953 = ssub.s32 2048, 2048
          %954 = vsyncadd %s944, %s953
          %s955 = smul.addr %s951, 128
          %s956 = scalar_lea.hbm %s7, %s955
          %s957 = sshll.u32 %s947, 4
          %s958 = int_to_ptr.vmem [resolvable:$true] %s957
          %963 = dma.vmem_to_hbm [thread:$0]  %s958, 2048, %s956, %s944, 128, 128, 8
        $region68: #{tpu_custom_call.1} parent=47 // pred_fallthru
          _
      $region48: #{tpu_custom_call.1} parent=5 // pred_fallthru
        _
      %p964 = scmp.le.s32.totalorder 2, %s21
      // Predicated region
      $region69: #{tpu_custom_call.1} parent=5 // pred_check
        %p965 = pneg %p964
      $region70: #{tpu_custom_call.1} parent=5 // pred_check_branch
        %967 = sbr.rel (%p965) target = $region72
      $region71: #{tpu_custom_call.1} parent=5 // pred_region
        %s968 = ssub.s32 %s21, 2
        // Predicated region
        $region73: #{tpu_custom_call.1} parent=71 // pred_check
          %p969 = pneg %p202
        $region74: #{tpu_custom_call.1} parent=71 // pred_check_branch
          %971 = sbr.rel (%p969) target = $region76
        $region75: #{tpu_custom_call.1} parent=71 // pred_region
          %s972 = sand.u32 %s187, 1
          %s973 = scalar_lea.sflag [#allocation4], %s972
          %s974 = sand.u32 %s187, 1
          %s975 = smul.addr %s974, 128
          %s976 = scalar_lea.vmem [#allocation10], %s975
          %977 = dma.done %s973, 2048
        $region76: #{tpu_custom_call.1} parent=71 // pred_fallthru
          _
      $region72: #{tpu_custom_call.1} parent=5 // pred_fallthru
        _
    $region6: #{tpu_custom_call.1} parent=1 // loop_footer
      %s25 = sadd.s32 1, %s21
    $region7: #{tpu_custom_call.1} parent=1 // loop_footer_branch
      %20 = sbr.rel target = $region3
    $region8: #{tpu_custom_call.1} parent=1 // loop_exit
      _
    %978 = vsyncpa [#allocation3], 1
    %s979 = scalar_lea.sflag [#allocation3], 1
    %980 = vsyncpa %s979, 1
    %981 = vsyncpa [#allocation6], 1
    %982 = vsyncpa [#allocation9], 1
    %983 = vsyncpa [#allocation4], 1
    %s984 = scalar_lea.sflag [#allocation4], 1
    %985 = vsyncpa %s984, 1

</llo_original>
